<compile_context>
chip_gen: v5e
topology: v5e:2x2
jax: 0.10.0
libtpu: 0.0.40
codegen_flags: <defaults>
</compile_context>

<pallas_src>
import functools

import jax
import jax.numpy as jnp
from jax.experimental import pallas as pl
from jax.experimental.pallas import tpu as pltpu


def _causal_conv1d_kernel(w_ref, b_ref, x_ref, o_ref, *scratch,
                          K, dilation, TL, pad, halo_off):
    """One (batch, cout-tile, time-tile) grid step.

    w_ref: (TCo, K*Cin)   fused weight-normalized filters (compute dtype)
    b_ref: (TCo, 1)       bias (f32)
    x_ref: (1, Cin, TL)   current time tile of the input
    o_ref: (1, TCo, TL)   output tile
    scratch (pad > 0):
      x_buf : (Cin, halo_off + TL) compute dtype; [... | halo(pad) | tile(TL)],
              the tile starts at lane offset halo_off (a multiple of 128).
      xp_buf: (K*Cin, TL) compute dtype; packed shifted taps for the fused dot.
    """
    if pad > 0:
        x_buf, xp_buf = scratch
        t = pl.program_id(2)
        cin = x_buf.shape[0]

        @pl.when(t == 0)
        def _zero_halo():
            # Causal left boundary: the first time tile of each row sees zeros.
            x_buf[:, halo_off - pad:halo_off] = jnp.zeros((cin, pad), x_buf.dtype)

        @pl.when(t > 0)
        def _carry_halo():
            # The last `pad` columns seen so far become this tile's left halo.
            x_buf[:, halo_off - pad:halo_off] = \
                x_buf[:, halo_off + TL - pad:halo_off + TL]

        # Lane-aligned store of the tile; single cast into the compute dtype.
        x_buf[:, halo_off:] = x_ref[0].astype(x_buf.dtype)

        # Pack the K shifted taps -> one fused (TCo,K*Cin)@(K*Cin,TL) matmul.
        for j in range(K):
            s = halo_off - pad + j * dilation      # static slice start
            xp_buf[j * cin:(j + 1) * cin, :] = x_buf[:, s:s + TL]
        xp = xp_buf[...]
    else:
        # K == 1: no padding, no halo, no packing.
        xp = x_ref[0].astype(w_ref.dtype)

    acc = jnp.dot(w_ref[...], xp, preferred_element_type=jnp.float32) + b_ref[...]
    o_ref[0] = acc.astype(o_ref.dtype)


def _round_up(x, m):
    return ((x + m - 1) // m) * m


def _vmem_capacity_bytes():
    """Physical VMEM of the current generation (conservative fallback)."""
    try:
        cap = getattr(pltpu.get_tpu_info(), "vmem_capacity_bytes", None)
        if cap:
            return int(cap)
    except Exception:
        pass
    return 64 * 1024 * 1024  # v7x-sized default; safe on every generation


def causal_conv1d(x, v, g, bias, *, kernel_size, dilation=1, stride=1,
                  compute_dtype=jnp.bfloat16, max_time_tile=2048):
    """x: (B, Cin, L).  v: (Cout, Cin, K).  g: (Cout,).  bias: (Cout,).

    Returns (B, Cout, L) in x.dtype.  Best performance when L >= 1024 and
    Cout % 8 == 0 (lane-dense, unmasked output stores).
    """
    assert stride == 1, "stride != 1 not implemented"  # TODO(synk): general stride
    B, Cin, L = x.shape
    Cout = v.shape[0]
    K = kernel_size
    pad = (K - 1) * dilation
    halo_off = _round_up(pad, 128) if pad > 0 else 0   # 128-aligned tile offset

    # --- weight_norm (plain JAX preprocessing, f32): w[o] = g[o] * v[o] / ||v[o]||_F
    # (no epsilon -- matches PyTorch; an all-zero filter would NaN there too)
    v32 = v.astype(jnp.float32)
    norm = jnp.sqrt(jnp.sum(v32 * v32, axis=(1, 2), keepdims=True))
    w = g.astype(jnp.float32).reshape(Cout, 1, 1) * v32 / norm        # (Cout, Cin, K)
    # Fused layout: column block j holds tap j  ->  (Cout, K*Cin).
    w_fused = jnp.transpose(w, (0, 2, 1)).reshape(Cout, K * Cin).astype(compute_dtype)
    b2 = bias.reshape(Cout, 1).astype(jnp.float32)

    # --- Cout tiling: second parallel grid axis (v7x megacore when B is small)
    #     and bounded per-step weight / output footprint for large channels.
    TCo = 256 if (Cout > 256 and Cout % 256 == 0) else Cout
    n_co = Cout // TCo
    single_buf_consts = (n_co == 1)   # weights/bias grid-invariant -> fetch once

    # --- time-tile size from the per-generation VMEM budget
    x_item = jnp.dtype(x.dtype).itemsize
    c_item = jnp.dtype(compute_dtype).itemsize
    w_bufs = 1 if single_buf_consts else 2

    def est(tl):
        scr = (Cin * (halo_off + tl) + K * Cin * tl) * c_item if pad > 0 else 0
        return (2 * Cin * tl * x_item                 # input tile (double-buffered)
                + 2 * TCo * tl * x_item               # output tile (double-buffered)
                + scr                                 # halo + packed-tap scratch
                + w_bufs * (TCo * K * Cin * c_item + TCo * 4)
                + 2 * TCo * tl * 4)                   # f32 matmul / acc headroom

    cap = (_vmem_capacity_bytes() * 3) // 4           # ~48 MiB v7x, ~96 MiB v5e/v6e
    if L <= 128:
        TL = L                                        # single (possibly masked) tile
    else:
        TL = max(128, (min(max_time_tile, _round_up(L, 128)) // 128) * 128)
        while TL > 128 and est(TL) > cap // 2:
            TL -= 128
    n_t = pl.cdiv(L, TL)                              # remainder tile is masked
    vmem_limit = int(min(cap, max(32 * 1024 * 1024, 2 * est(TL))))

    scratch = []
    if pad > 0:
        scratch = [pltpu.VMEM((Cin, halo_off + TL), compute_dtype),
                   pltpu.VMEM((K * Cin, TL), compute_dtype)]

    # CORRECTNESS: the halo carry requires the time axis to execute in order
    # within each (batch, cout-tile).  Keep t as the innermost grid axis and
    # never mark it "parallel" while pad > 0.
    t_sem = "arbitrary" if pad > 0 else "parallel"
    assert pad == 0 or t_sem == "arbitrary"

    kern = functools.partial(_causal_conv1d_kernel, K=K, dilation=dilation,
                             TL=TL, pad=pad, halo_off=halo_off)

    def build(single_buffered):
        kw = {"pipeline_mode": pl.Buffered(1)} if single_buffered else {}
        w_spec = pl.BlockSpec((TCo, K * Cin), lambda b, co, t: (co, 0), **kw)
        b_spec = pl.BlockSpec((TCo, 1), lambda b, co, t: (co, 0), **kw)
        return pl.pallas_call(
            kern,
            out_shape=jax.ShapeDtypeStruct((B, Cout, L), x.dtype),
            grid_spec=pltpu.PrefetchScalarGridSpec(
                num_scalar_prefetch=0,
                grid=(B, n_co, n_t),
                in_specs=[
                    w_spec,
                    b_spec,
                    pl.BlockSpec((1, Cin, TL), lambda b, co, t: (b, 0, t)),
                ],
                out_specs=pl.BlockSpec((1, TCo, TL), lambda b, co, t: (b, co, t)),
                scratch_shapes=scratch,
            ),
            compiler_params=pltpu.CompilerParams(
                dimension_semantics=("parallel", "parallel", t_sem),
                vmem_limit_bytes=vmem_limit,
            ),
        )

    if single_buf_consts:
        try:
            return build(True)(w_fused, b2, x)
        except Exception:
            pass  # jax version without pipeline_mode / Buffered(1): fall back
    return build(False)(w_fused, b2, x)


def _reference(x, v, g, bias, *, kernel_size, dilation=1,
               compute_dtype=jnp.float32):
    """Pure-JAX reference of the PyTorch forward (left-only causal pad)."""
    Cout = v.shape[0]
    v32 = v.astype(jnp.float32)
    norm = jnp.sqrt(jnp.sum(v32 * v32, axis=(1, 2), keepdims=True))
    w = (g.astype(jnp.float32).reshape(Cout, 1, 1) * v32 / norm).astype(compute_dtype)
    pad = (kernel_size - 1) * dilation
    y = jax.lax.conv_general_dilated(
        x.astype(compute_dtype), w, window_strides=(1,), padding=[(pad, 0)],
        rhs_dilation=(dilation,),
        dimension_numbers=("NCH", "OIH", "NCH"),
        preferred_element_type=jnp.float32,
    )
    return y + bias.astype(jnp.float32).reshape(1, -1, 1)


if __name__ == "__main__":
    key = jax.random.PRNGKey(0)
    k1, k2, k3, k4 = jax.random.split(key, 4)

    def make_inputs(B, Cin, Cout, L, K):
        x = jax.random.normal(k1, (B, Cin, L), dtype=jnp.float32)
        v = jax.random.normal(k2, (Cout, Cin, K), dtype=jnp.float32) * 0.5
        g = jax.random.uniform(k3, (Cout,), dtype=jnp.float32, minval=0.5, maxval=1.5)
        bias = jax.random.normal(k4, (Cout,), dtype=jnp.float32) * 0.1
        return x, v, g, bias

    def check(tag, B, Cin, Cout, L, K, dil, *, compute_dtype=jnp.float32,
              max_time_tile=2048, atol=1e-5, rtol=1e-5):
        x, v, g, bias = make_inputs(B, Cin, Cout, L, K)
        out = jax.block_until_ready(
            causal_conv1d(x, v, g, bias, kernel_size=K, dilation=dil,
                          compute_dtype=compute_dtype,
                          max_time_tile=max_time_tile))
        ref = _reference(x, v, g, bias, kernel_size=K, dilation=dil,
                         compute_dtype=compute_dtype)
        assert out.shape == (B, Cout, L), f"shape mismatch: {tag}"
        assert jnp.allclose(out, ref, atol=atol, rtol=rtol), f"value mismatch: {tag}"

    # A: canonical small shape (single time tile), f32 and bf16 compute paths.
    check("A/f32", 2, 4, 8, 16, 3, 1)
    check("A/bf16", 2, 4, 8, 16, 3, 1, compute_dtype=jnp.bfloat16,
          atol=1e-2, rtol=1e-2)
    # B: multiple time tiles + dilation -> exercises the halo carry.
    check("B/f32", 2, 4, 8, 256, 3, 2, max_time_tile=128)
    # C: kernel_size == 1 (no padding / no halo / no packing path).
    check("C/f32", 2, 4, 8, 16, 1, 1)
    # D: L not a multiple of the time tile -> masked remainder tile.
    check("D/f32", 2, 4, 8, 200, 3, 1, max_time_tile=128)
    # E: Cout tiled (parallel Cout grid axis, TCo=256) + halo carry, B=1.
    check("E/f32", 1, 8, 512, 384, 3, 1, max_time_tile=128,
          atol=1e-4, rtol=1e-3)

    print("KERNEL_OK")
</pallas_src>

<mosaic_0001>
module attributes {stable_mosaic.version = 11 : i64} {
  func.func @_causal_conv1d_kernel(%arg0: i32, %arg1: i32, %arg2: i32, %arg3: memref<8x12xf32, #tpu.memory_space<vmem>>, %arg4: memref<8x1xf32, #tpu.memory_space<vmem>>, %arg5: memref<1x4x16xf32, #tpu.memory_space<vmem>>, %arg6: memref<1x8x16xf32, #tpu.memory_space<vmem>>, %arg7: memref<4x144xf32, #tpu.memory_space<vmem>>, %arg8: memref<12x16xf32, #tpu.memory_space<vmem>>) attributes {dimension_semantics = [#tpu.dimension_semantics<parallel>, #tpu.dimension_semantics<parallel>, #tpu.dimension_semantics<arbitrary>], iteration_bounds = array<i64: 2, 1, 1>, scalar_prefetch = 0 : i64, scratch_operands = 2 : i64, tpu.core_type = #tpu.core_type<tc>, window_params = [{pipeline_mode = #tpu.pipeline_mode<synchronous>, transform_indices = @transform_0, window_bounds = array<i64: 8, 12>}, {pipeline_mode = #tpu.pipeline_mode<synchronous>, transform_indices = @transform_1, window_bounds = array<i64: 8, 1>}, {transform_indices = @transform_2, window_bounds = array<i64: 1, 4, 16>}, {transform_indices = @transform_3, window_bounds = array<i64: 1, 8, 16>}]} {
    %c0_i32 = arith.constant 0 : i32
    %0 = arith.cmpi eq, %arg2, %c0_i32 : i32
    %1 = arith.extui %0 : i1 to i32
    %c0_i32_0 = arith.constant 0 : i32
    %2 = arith.cmpi ne, %1, %c0_i32_0 : i32
    scf.if %2 {
      %cst_23 = arith.constant 0.000000e+00 : f32
      %24 = vector.broadcast %cst_23 : f32 to vector<4x2xf32>
      %c0_24 = arith.constant 0 : index
      %c126_25 = arith.constant 126 : index
      %25 = vector.load %arg7[%c0_24, %c126_25] : memref<4x144xf32, #tpu.memory_space<vmem>>, vector<4x2xf32>
      tpu.vector_store %arg7[%c0_24, %c126_25], %24 {strides = array<i32>} : memref<4x144xf32, #tpu.memory_space<vmem>>, vector<4x2xf32>,
    } else {
    }
    %c0_i32_1 = arith.constant 0 : i32
    %3 = arith.cmpi sgt, %arg2, %c0_i32_1 : i32
    %4 = arith.extui %3 : i1 to i32
    %c0_i32_2 = arith.constant 0 : i32
    %5 = arith.cmpi ne, %4, %c0_i32_2 : i32
    scf.if %5 {
      %c0_23 = arith.constant 0 : index
      %c142 = arith.constant 142 : index
      %24 = vector.load %arg7[%c0_23, %c142] : memref<4x144xf32, #tpu.memory_space<vmem>>, vector<4x2xf32>
      %c0_24 = arith.constant 0 : index
      %c126_25 = arith.constant 126 : index
      %25 = vector.load %arg7[%c0_24, %c126_25] : memref<4x144xf32, #tpu.memory_space<vmem>>, vector<4x2xf32>
      tpu.vector_store %arg7[%c0_24, %c126_25], %24 {strides = array<i32>} : memref<4x144xf32, #tpu.memory_space<vmem>>, vector<4x2xf32>,
    } else {
    }
    %c0 = arith.constant 0 : index
    %c0_3 = arith.constant 0 : index
    %c0_4 = arith.constant 0 : index
    %6 = vector.load %arg5[%c0, %c0_3, %c0_4] : memref<1x4x16xf32, #tpu.memory_space<vmem>>, vector<1x4x16xf32>
    %7 = vector.shape_cast %6 : vector<1x4x16xf32> to vector<4x16xf32>
    %c0_5 = arith.constant 0 : index
    %c128 = arith.constant 128 : index
    %8 = vector.load %arg7[%c0_5, %c128] : memref<4x144xf32, #tpu.memory_space<vmem>>, vector<4x16xf32>
    tpu.vector_store %arg7[%c0_5, %c128], %7 {strides = array<i32>} : memref<4x144xf32, #tpu.memory_space<vmem>>, vector<4x16xf32>,
    %c0_6 = arith.constant 0 : index
    %c126 = arith.constant 126 : index
    %9 = vector.load %arg7[%c0_6, %c126] : memref<4x144xf32, #tpu.memory_space<vmem>>, vector<4x16xf32>
    %c0_7 = arith.constant 0 : index
    %c0_8 = arith.constant 0 : index
    %10 = vector.load %arg8[%c0_7, %c0_8] : memref<12x16xf32, #tpu.memory_space<vmem>>, vector<4x16xf32>
    tpu.vector_store %arg8[%c0_7, %c0_8], %9 {strides = array<i32>} : memref<12x16xf32, #tpu.memory_space<vmem>>, vector<4x16xf32>,
    %c0_9 = arith.constant 0 : index
    %c127 = arith.constant 127 : index
    %11 = vector.load %arg7[%c0_9, %c127] : memref<4x144xf32, #tpu.memory_space<vmem>>, vector<4x16xf32>
    %c4 = arith.constant 4 : index
    %c0_10 = arith.constant 0 : index
    %12 = vector.load %arg8[%c4, %c0_10] : memref<12x16xf32, #tpu.memory_space<vmem>>, vector<4x16xf32>
    tpu.vector_store %arg8[%c4, %c0_10], %11 {strides = array<i32>} : memref<12x16xf32, #tpu.memory_space<vmem>>, vector<4x16xf32>,
    %c0_11 = arith.constant 0 : index
    %c128_12 = arith.constant 128 : index
    %13 = vector.load %arg7[%c0_11, %c128_12] : memref<4x144xf32, #tpu.memory_space<vmem>>, vector<4x16xf32>
    %c8 = arith.constant 8 : index
    %c0_13 = arith.constant 0 : index
    %14 = vector.load %arg8[%c8, %c0_13] : memref<12x16xf32, #tpu.memory_space<vmem>>, vector<4x16xf32>
    tpu.vector_store %arg8[%c8, %c0_13], %13 {strides = array<i32>} : memref<12x16xf32, #tpu.memory_space<vmem>>, vector<4x16xf32>,
    %c0_14 = arith.constant 0 : index
    %c0_15 = arith.constant 0 : index
    %15 = vector.load %arg8[%c0_14, %c0_15] : memref<12x16xf32, #tpu.memory_space<vmem>>, vector<12x16xf32>
    %c0_16 = arith.constant 0 : index
    %c0_17 = arith.constant 0 : index
    %16 = vector.load %arg3[%c0_16, %c0_17] : memref<8x12xf32, #tpu.memory_space<vmem>>, vector<8x12xf32>
    %cst = arith.constant dense<0.000000e+00> : vector<8x16xf32>
    %17 = tpu.matmul %16, %15, %cst {dimension_numbers = #tpu.dot_dimension_numbers<[1], [0], [0], [1], [0, 0, 1, 1], [], []>} : vector<8x12xf32>, vector<12x16xf32>, vector<8x16xf32> -> vector<8x16xf32>
    %c0_18 = arith.constant 0 : index
    %c0_19 = arith.constant 0 : index
    %18 = vector.load %arg4[%c0_18, %c0_19] : memref<8x1xf32, #tpu.memory_space<vmem>>, vector<8x1xf32>
    %19 = vector.broadcast %18 : vector<8x1xf32> to vector<8x16xf32>
    %20 = arith.addf %17, %19 : vector<8x16xf32>
    %c0_20 = arith.constant 0 : index
    %c0_21 = arith.constant 0 : index
    %c0_22 = arith.constant 0 : index
    %21 = vector.load %arg6[%c0_20, %c0_21, %c0_22] : memref<1x8x16xf32, #tpu.memory_space<vmem>>, vector<1x8x16xf32>
    %22 = vector.shape_cast %21 : vector<1x8x16xf32> to vector<8x16xf32>
    %23 = vector.shape_cast %20 : vector<8x16xf32> to vector<1x8x16xf32>
    tpu.vector_store %arg6[%c0_20, %c0_21, %c0_22], %23 {strides = array<i32>} : memref<1x8x16xf32, #tpu.memory_space<vmem>>, vector<1x8x16xf32>,
    return
  }
  func.func @transform_0(%arg0: i32, %arg1: i32, %arg2: i32) -> (i32, i32) {
    %c0_i32 = arith.constant 0 : i32
    %c0_i32_0 = arith.constant 0 : i32
    return %arg1, %c0_i32 : i32, i32
  }
  func.func @transform_1(%arg0: i32, %arg1: i32, %arg2: i32) -> (i32, i32) {
    %c0_i32 = arith.constant 0 : i32
    %c0_i32_0 = arith.constant 0 : i32
    return %arg1, %c0_i32 : i32, i32
  }
  func.func @transform_2(%arg0: i32, %arg1: i32, %arg2: i32) -> (i32, i32, i32) {
    %c0_i32 = arith.constant 0 : i32
    %c0_i32_0 = arith.constant 0 : i32
    return %arg0, %c0_i32, %arg2 : i32, i32, i32
  }
  func.func @transform_3(%arg0: i32, %arg1: i32, %arg2: i32) -> (i32, i32, i32) {
    %c0_i32 = arith.constant 0 : i32
    return %arg0, %arg1, %arg2 : i32, i32, i32
  }
}

module attributes {stable_mosaic.version = 11 : i64} {
  func.func @_causal_conv1d_kernel(%arg0: i32, %arg1: i32, %arg2: i32, %arg3: memref<8x12xf32, #tpu.memory_space<vmem>>, %arg4: memref<8x1xf32, #tpu.memory_space<vmem>>, %arg5: memref<1x4x16xf32, #tpu.memory_space<vmem>>, %arg6: memref<1x8x16xf32, #tpu.memory_space<vmem>>, %arg7: memref<4x144xf32, #tpu.memory_space<vmem>>, %arg8: memref<12x16xf32, #tpu.memory_space<vmem>>) attributes {dimension_semantics = [#tpu.dimension_semantics<parallel>, #tpu.dimension_semantics<parallel>, #tpu.dimension_semantics<arbitrary>], iteration_bounds = array<i64: 2, 1, 1>, scalar_prefetch = 0 : i64, scratch_operands = 2 : i64, tpu.core_type = #tpu.core_type<tc>, window_params = [{transform_indices = @transform_0, window_bounds = array<i64: 8, 12>}, {transform_indices = @transform_1, window_bounds = array<i64: 8, 1>}, {transform_indices = @transform_2, window_bounds = array<i64: 1, 4, 16>}, {transform_indices = @transform_3, window_bounds = array<i64: 1, 8, 16>}]} {
    %c0_i32 = arith.constant 0 : i32
    %0 = arith.cmpi eq, %arg2, %c0_i32 : i32
    %1 = arith.extui %0 : i1 to i32
    %c0_i32_0 = arith.constant 0 : i32
    %2 = arith.cmpi ne, %1, %c0_i32_0 : i32
    scf.if %2 {
      %cst_23 = arith.constant 0.000000e+00 : f32
      %24 = vector.broadcast %cst_23 : f32 to vector<4x2xf32>
      %c0_24 = arith.constant 0 : index
      %c126_25 = arith.constant 126 : index
      %25 = vector.load %arg7[%c0_24, %c126_25] : memref<4x144xf32, #tpu.memory_space<vmem>>, vector<4x2xf32>
      tpu.vector_store %arg7[%c0_24, %c126_25], %24 {strides = array<i32>} : memref<4x144xf32, #tpu.memory_space<vmem>>, vector<4x2xf32>,
    } else {
    }
    %c0_i32_1 = arith.constant 0 : i32
    %3 = arith.cmpi sgt, %arg2, %c0_i32_1 : i32
    %4 = arith.extui %3 : i1 to i32
    %c0_i32_2 = arith.constant 0 : i32
    %5 = arith.cmpi ne, %4, %c0_i32_2 : i32
    scf.if %5 {
      %c0_23 = arith.constant 0 : index
      %c142 = arith.constant 142 : index
      %24 = vector.load %arg7[%c0_23, %c142] : memref<4x144xf32, #tpu.memory_space<vmem>>, vector<4x2xf32>
      %c0_24 = arith.constant 0 : index
      %c126_25 = arith.constant 126 : index
      %25 = vector.load %arg7[%c0_24, %c126_25] : memref<4x144xf32, #tpu.memory_space<vmem>>, vector<4x2xf32>
      tpu.vector_store %arg7[%c0_24, %c126_25], %24 {strides = array<i32>} : memref<4x144xf32, #tpu.memory_space<vmem>>, vector<4x2xf32>,
    } else {
    }
    %c0 = arith.constant 0 : index
    %c0_3 = arith.constant 0 : index
    %c0_4 = arith.constant 0 : index
    %6 = vector.load %arg5[%c0, %c0_3, %c0_4] : memref<1x4x16xf32, #tpu.memory_space<vmem>>, vector<1x4x16xf32>
    %7 = vector.shape_cast %6 : vector<1x4x16xf32> to vector<4x16xf32>
    %c0_5 = arith.constant 0 : index
    %c128 = arith.constant 128 : index
    %8 = vector.load %arg7[%c0_5, %c128] : memref<4x144xf32, #tpu.memory_space<vmem>>, vector<4x16xf32>
    tpu.vector_store %arg7[%c0_5, %c128], %7 {strides = array<i32>} : memref<4x144xf32, #tpu.memory_space<vmem>>, vector<4x16xf32>,
    %c0_6 = arith.constant 0 : index
    %c126 = arith.constant 126 : index
    %9 = vector.load %arg7[%c0_6, %c126] : memref<4x144xf32, #tpu.memory_space<vmem>>, vector<4x16xf32>
    %c0_7 = arith.constant 0 : index
    %c0_8 = arith.constant 0 : index
    %10 = vector.load %arg8[%c0_7, %c0_8] : memref<12x16xf32, #tpu.memory_space<vmem>>, vector<4x16xf32>
    tpu.vector_store %arg8[%c0_7, %c0_8], %9 {strides = array<i32>} : memref<12x16xf32, #tpu.memory_space<vmem>>, vector<4x16xf32>,
    %c0_9 = arith.constant 0 : index
    %c127 = arith.constant 127 : index
    %11 = vector.load %arg7[%c0_9, %c127] : memref<4x144xf32, #tpu.memory_space<vmem>>, vector<4x16xf32>
    %c4 = arith.constant 4 : index
    %c0_10 = arith.constant 0 : index
    %12 = vector.load %arg8[%c4, %c0_10] : memref<12x16xf32, #tpu.memory_space<vmem>>, vector<4x16xf32>
    tpu.vector_store %arg8[%c4, %c0_10], %11 {strides = array<i32>} : memref<12x16xf32, #tpu.memory_space<vmem>>, vector<4x16xf32>,
    %c0_11 = arith.constant 0 : index
    %c128_12 = arith.constant 128 : index
    %13 = vector.load %arg7[%c0_11, %c128_12] : memref<4x144xf32, #tpu.memory_space<vmem>>, vector<4x16xf32>
    %c8 = arith.constant 8 : index
    %c0_13 = arith.constant 0 : index
    %14 = vector.load %arg8[%c8, %c0_13] : memref<12x16xf32, #tpu.memory_space<vmem>>, vector<4x16xf32>
    tpu.vector_store %arg8[%c8, %c0_13], %13 {strides = array<i32>} : memref<12x16xf32, #tpu.memory_space<vmem>>, vector<4x16xf32>,
    %c0_14 = arith.constant 0 : index
    %c0_15 = arith.constant 0 : index
    %15 = vector.load %arg8[%c0_14, %c0_15] : memref<12x16xf32, #tpu.memory_space<vmem>>, vector<12x16xf32>
    %c0_16 = arith.constant 0 : index
    %c0_17 = arith.constant 0 : index
    %16 = vector.load %arg3[%c0_16, %c0_17] : memref<8x12xf32, #tpu.memory_space<vmem>>, vector<8x12xf32>
    %cst = arith.constant dense<0.000000e+00> : vector<8x16xf32>
    %17 = tpu.matmul %16, %15, %cst {dimension_numbers = #tpu.dot_dimension_numbers<[1], [0], [0], [1], [0, 0, 1, 1], [], []>} : vector<8x12xf32>, vector<12x16xf32>, vector<8x16xf32> -> vector<8x16xf32>
    %c0_18 = arith.constant 0 : index
    %c0_19 = arith.constant 0 : index
    %18 = vector.load %arg4[%c0_18, %c0_19] : memref<8x1xf32, #tpu.memory_space<vmem>>, vector<8x1xf32>
    %19 = vector.broadcast %18 : vector<8x1xf32> to vector<8x16xf32>
    %20 = arith.addf %17, %19 : vector<8x16xf32>
    %c0_20 = arith.constant 0 : index
    %c0_21 = arith.constant 0 : index
    %c0_22 = arith.constant 0 : index
    %21 = vector.load %arg6[%c0_20, %c0_21, %c0_22] : memref<1x8x16xf32, #tpu.memory_space<vmem>>, vector<1x8x16xf32>
    %22 = vector.shape_cast %21 : vector<1x8x16xf32> to vector<8x16xf32>
    %23 = vector.shape_cast %20 : vector<8x16xf32> to vector<1x8x16xf32>
    tpu.vector_store %arg6[%c0_20, %c0_21, %c0_22], %23 {strides = array<i32>} : memref<1x8x16xf32, #tpu.memory_space<vmem>>, vector<1x8x16xf32>,
    return
  }
  func.func @transform_0(%arg0: i32, %arg1: i32, %arg2: i32) -> (i32, i32) {
    %c0_i32 = arith.constant 0 : i32
    %c0_i32_0 = arith.constant 0 : i32
    return %arg1, %c0_i32 : i32, i32
  }
  func.func @transform_1(%arg0: i32, %arg1: i32, %arg2: i32) -> (i32, i32) {
    %c0_i32 = arith.constant 0 : i32
    %c0_i32_0 = arith.constant 0 : i32
    return %arg1, %c0_i32 : i32, i32
  }
  func.func @transform_2(%arg0: i32, %arg1: i32, %arg2: i32) -> (i32, i32, i32) {
    %c0_i32 = arith.constant 0 : i32
    %c0_i32_0 = arith.constant 0 : i32
    return %arg0, %c0_i32, %arg2 : i32, i32, i32
  }
  func.func @transform_3(%arg0: i32, %arg1: i32, %arg2: i32) -> (i32, i32, i32) {
    %c0_i32 = arith.constant 0 : i32
    return %arg0, %arg1, %arg2 : i32, i32, i32
  }
}

</mosaic_0001>

<llo_original>
// kernel: tpu_custom_call.1
$region0: #{tpu_custom_call.1}
  #allocation0 [shape = 'u32[]', space=smem, size = 0x4, offset = 0x4, fixed_abs, tag = 'smem constant byte address 0x4 - core index']
  #allocation1 [shape = 'u32[72,128]{1,0:T(1,128)}', space=vmem, size = 0x9000, scoped, tag = 'internal scratch']
  #allocation2 [shape = 'f32[4,144]{1,0:T(4,128)}', space=vmem, size = 0x1000, scoped, tag = 'scratch operand']
  #allocation3 [shape = 'f32[12,16]{1,0:T(8,128)}', space=vmem, size = 0x2000, scoped, tag = 'scratch operand']
  %s0 = inlined_call_operand.vmem [shape: f32[8,12], index: 0, kind: input, shape index: {}]
  %s1 = inlined_call_operand.vmem [shape: f32[8,1], index: 1, kind: input, shape index: {}]
  %s2 = inlined_call_operand.hbm [shape: f32[2,4,16], index: 2, kind: input, shape index: {}]
  %s3 = inlined_call_operand.hbm [shape: f32[2,8,16], index: 3, kind: output, shape index: {}]
  %s4 = sld [smem:[#allocation0]]
  $region57: #{tpu_custom_call.1} parent=0
    _
  %s6 = ssub.s32 1, %s4
  %s7 = scalar_select 0, %s6, %s4
  $region1: #{tpu_custom_call.1} parent=0
    #allocation4 [shape = 'u8[4096]{0}', space=vmem, size = 0x1000, scoped, tag = 'input window, operand 2']
    #allocation5 [shape = 's32[2]{0}', space=sflag, size = 0x8, scoped, tag = 'scoped memory for tpu_custom_call.1']
    #allocation6 [shape = 's32[2]{0}', space=sflag, size = 0x8, scoped, tag = 'scoped memory for tpu_custom_call.1']
    #allocation7 [shape = 'u8[8192]{0}', space=vmem, size = 0x2000, scoped, tag = 'output window, operand 0']
    %8 = vsyncpa [#allocation5], 0
    %s9 = scalar_lea.sflag [#allocation5], 1
    %10 = vsyncpa %s9, 0
    %11 = vsyncpa [#allocation6], 0
    %s12 = scalar_lea.sflag [#allocation6], 1
    %13 = vsyncpa %s12, 0
    loop: start=0, step=1, limit=4
    $region2: #{tpu_custom_call.1} parent=1 // loop_pre_header
      _
    $region3: #{tpu_custom_call.1} parent=1 // loop_header
      %s15 = sphi 0, %s19
      %p16 = scmp.ge.s32.totalorder %s15, 4
      %s22 = sphi 0, %s41
      %s23 = sphi 0, %s37
      %s24 = sphi 0, %s33
      %s25 = sphi 0, %s22
      %s26 = sphi 0, %s23
      %s27 = sphi 0, %s24
      %s28 = sphi 0, %s25
      %s29 = sphi 0, %s26
      %s30 = sphi 0, %s27
      %s44 = sphi 0, %s46
      %s47 = sphi 0, %s44
      %s48 = sphi 0, %s47
      %s64 = sphi 0, %s48
      %s70 = sphi 0, %s72
      %s73 = sphi 0, %s70
      %s74 = sphi 0, %s73
      %s90 = sphi 0, %s74
      %s98 = sphi 0, %s100
      %s101 = sphi 0, %s98
      %s102 = sphi 0, %s101
      %s118 = sphi 0, %s102
      %s128 = sphi 0, %s130
      %s131 = sphi 0, %s128
      %s132 = sphi 0, %s131
      %s148 = sphi 0, %s132
    $region4: #{tpu_custom_call.1} parent=1 // loop_header_branch
      %18 = sbr.rel (%p16) target = $region8
    $region5: #{tpu_custom_call.1} parent=1 // loop_body
      %s20 = ssub.s32 %s15, 1
      %s21 = ssub.s32 %s15, 2
      %s31 = sadd.s32 1, %s24
      %p32 = scmp.ge.s32.totalorder %s31, 1
      %s33 = scalar_select %p32, 0, %s31
      %s34 = sadd.s32 1, %s23
      %s35 = scalar_select %p32, %s34, %s23
      %p36 = scmp.ge.s32.totalorder %s35, 1
      %s37 = scalar_select %p36, 0, %s35
      %s38 = sadd.s32 1, %s22
      %s39 = scalar_select %p36, %s38, %s22
      %p40 = scmp.ge.s32.totalorder %s39, 2
      %s41 = scalar_select %p40, 0, %s39
      %s42 = ssub.s32 %s23, %s37
      %p43 = scmp.eq.s32.totalorder %s42, 0
      %s45 = sadd.s32 %s44, 1
      %s46 = scalar_select %p43, %s44, %s45
      %p49 = pneg %p43
      %p50 = scmp.eq.s32.totalorder %s15, 1
      %p51 = por %p49, %p50
      %p52 = scmp.ne.s32.totalorder %s44, %s47
      %p53 = scmp.eq.s32.totalorder %s15, 0
      %p54 = por %p52, %p53
      %p55 = scmp.ne.s32.totalorder %s44, %s47
      %p56 = scmp.eq.s32.totalorder %s20, 1
      %p57 = por %p55, %p56
      %p58 = scmp.ne.s32.totalorder %s47, %s48
      %p59 = scmp.eq.s32.totalorder %s20, 0
      %p60 = por %p58, %p59
      %p61 = scmp.ne.s32.totalorder %s47, %s48
      %p62 = scmp.eq.s32.totalorder %s21, 1
      %p63 = por %p61, %p62
      %p65 = scmp.ne.s32.totalorder %s48, %s64
      %p66 = scmp.eq.s32.totalorder %s21, 0
      %p67 = por %p65, %p66
      %s68 = ssub.s32 %s23, %s37
      %p69 = scmp.eq.s32.totalorder %s68, 0
      %s71 = sadd.s32 %s70, 1
      %s72 = scalar_select %p69, %s70, %s71
      %p75 = pneg %p69
      %p76 = scmp.eq.s32.totalorder %s15, 1
      %p77 = por %p75, %p76
      %p78 = scmp.ne.s32.totalorder %s70, %s73
      %p79 = scmp.eq.s32.totalorder %s15, 0
      %p80 = por %p78, %p79
      %p81 = scmp.ne.s32.totalorder %s70, %s73
      %p82 = scmp.eq.s32.totalorder %s20, 1
      %p83 = por %p81, %p82
      %p84 = scmp.ne.s32.totalorder %s73, %s74
      %p85 = scmp.eq.s32.totalorder %s20, 0
      %p86 = por %p84, %p85
      %p87 = scmp.ne.s32.totalorder %s73, %s74
      %p88 = scmp.eq.s32.totalorder %s21, 1
      %p89 = por %p87, %p88
      %p91 = scmp.ne.s32.totalorder %s74, %s90
      %p92 = scmp.eq.s32.totalorder %s21, 0
      %p93 = por %p91, %p92
      %s94 = ssub.s32 %s22, %s41
      %s95 = ssub.s32 %s24, %s33
      %s96 = sor.u32 %s94, %s95
      %p97 = scmp.eq.s32.totalorder %s96, 0
      %s99 = sadd.s32 %s98, 1
      %s100 = scalar_select %p97, %s98, %s99
      %p103 = pneg %p97
      %p104 = scmp.eq.s32.totalorder %s15, 1
      %p105 = por %p103, %p104
      %p106 = scmp.ne.s32.totalorder %s98, %s101
      %p107 = scmp.eq.s32.totalorder %s15, 0
      %p108 = por %p106, %p107
      %p109 = scmp.ne.s32.totalorder %s98, %s101
      %p110 = scmp.eq.s32.totalorder %s20, 1
      %p111 = por %p109, %p110
      %p112 = scmp.ne.s32.totalorder %s101, %s102
      %p113 = scmp.eq.s32.totalorder %s20, 0
      %p114 = por %p112, %p113
      %p115 = scmp.ne.s32.totalorder %s101, %s102
      %p116 = scmp.eq.s32.totalorder %s21, 1
      %p117 = por %p115, %p116
      %p119 = scmp.ne.s32.totalorder %s102, %s118
      %p120 = scmp.eq.s32.totalorder %s21, 0
      %p121 = por %p119, %p120
      %s122 = ssub.s32 %s22, %s41
      %s123 = ssub.s32 %s23, %s37
      %s124 = sor.u32 %s122, %s123
      %s125 = ssub.s32 %s24, %s33
      %s126 = sor.u32 %s124, %s125
      %p127 = scmp.eq.s32.totalorder %s126, 0
      %s129 = sadd.s32 %s128, 1
      %s130 = scalar_select %p127, %s128, %s129
      %p133 = pneg %p127
      %p134 = scmp.eq.s32.totalorder %s15, 1
      %p135 = por %p133, %p134
      %p136 = scmp.ne.s32.totalorder %s128, %s131
      %p137 = scmp.eq.s32.totalorder %s15, 0
      %p138 = por %p136, %p137
      %p139 = scmp.ne.s32.totalorder %s128, %s131
      %p140 = scmp.eq.s32.totalorder %s20, 1
      %p141 = por %p139, %p140
      %p142 = scmp.ne.s32.totalorder %s131, %s132
      %p143 = scmp.eq.s32.totalorder %s20, 0
      %p144 = por %p142, %p143
      %p145 = scmp.ne.s32.totalorder %s131, %s132
      %p146 = scmp.eq.s32.totalorder %s21, 1
      %p147 = por %p145, %p146
      %p149 = scmp.ne.s32.totalorder %s132, %s148
      %p150 = scmp.eq.s32.totalorder %s21, 0
      %p151 = por %p149, %p150
      %p152 = scmp.le.s32.totalorder 1, %s15
      %p153 = scmp.lt.s32.totalorder %s15, 3
      %p154 = pnand %p152, %p153
      %p155 = pneg %p154
      // Predicated region
      $region9: #{tpu_custom_call.1} parent=5 // pred_check
        _
      $region10: #{tpu_custom_call.1} parent=5 // pred_check_branch
        %157 = sbr.rel (%p154) target = $region12
      $region11: #{tpu_custom_call.1} parent=5 // pred_region
        %s158 = ssub.s32 %s15, 1
        // Predicated region
        $region13: #{tpu_custom_call.1} parent=11 // pred_check
          %p159 = pneg %p60
        $region14: #{tpu_custom_call.1} parent=11 // pred_check_branch
          %161 = sbr.rel (%p159) target = $region16
        $region15: #{tpu_custom_call.1} parent=11 // pred_region
          %p162 = scmp.lt.s32.totalorder %s26, 0
          %s163 = scalar_select %p162, %s26, 0
          %s164 = smul.addr %s163, 8
          %s165 = scalar_lea.vmem %s0, %s164
        $region16: #{tpu_custom_call.1} parent=11 // pred_fallthru
          _
        // Predicated region
        $region17: #{tpu_custom_call.1} parent=11 // pred_check
          %p166 = pneg %p86
        $region18: #{tpu_custom_call.1} parent=11 // pred_check_branch
          %168 = sbr.rel (%p166) target = $region20
        $region19: #{tpu_custom_call.1} parent=11 // pred_region
          %p169 = scmp.lt.s32.totalorder %s26, 0
          %s170 = scalar_select %p169, %s26, 0
          %s171 = smul.addr %s170, 8
          %s172 = scalar_lea.vmem %s1, %s171
        $region20: #{tpu_custom_call.1} parent=11 // pred_fallthru
          _
      $region12: #{tpu_custom_call.1} parent=5 // pred_fallthru
        _
      %p173 = scmp.lt.s32.totalorder %s15, 2
      // Predicated region
      $region21: #{tpu_custom_call.1} parent=5 // pred_check
        %p174 = pneg %p173
      $region22: #{tpu_custom_call.1} parent=5 // pred_check_branch
        %176 = sbr.rel (%p174) target = $region24
      $region23: #{tpu_custom_call.1} parent=5 // pred_region
        // Predicated region
        $region25: #{tpu_custom_call.1} parent=23 // pred_check
          %p177 = pneg %p108
        $region26: #{tpu_custom_call.1} parent=23 // pred_check_branch
          %179 = sbr.rel (%p177) target = $region28
        $region27: #{tpu_custom_call.1} parent=23 // pred_region
          %s180 = sand.u32 %s98, 1
          %s181 = scalar_lea.sflag [#allocation5], %s180
          %s182 = sand.u32 %s98, 1
          %s183 = smul.addr %s182, 4
          %s184 = scalar_lea.vmem [#allocation4], %s183
          %186 = vsyncadd %s181, 0
          %s187 = sadd.s32 %s24, %s22
          %s188 = smul.addr %s187, 4
          %s189 = scalar_lea.hbm %s2, %s188
          %s191 = sshll.u32 %s189, 4
          %s192 = int_to_ptr.hbm [resolvable:$true] %s191
          %s193 = sshll.u32 %s184, 4
          %s194 = int_to_ptr.vmem [resolvable:$true] %s193
          %196 = dma.hbm_to_vmem [thread:$0]  %s192, 64, %s194, %s181
        $region28: #{tpu_custom_call.1} parent=23 // pred_fallthru
          _
      $region24: #{tpu_custom_call.1} parent=5 // pred_fallthru
        _
      %p197 = scmp.le.s32.totalorder 1, %s15
      %p198 = scmp.lt.s32.totalorder %s15, 3
      %p199 = pnand %p197, %p198
      %p200 = pneg %p199
      // Predicated region
      $region29: #{tpu_custom_call.1} parent=5 // pred_check
        _
      $region30: #{tpu_custom_call.1} parent=5 // pred_check_branch
        %202 = sbr.rel (%p199) target = $region32
      $region31: #{tpu_custom_call.1} parent=5 // pred_region
        %s203 = ssub.s32 %s15, 1
        %s204 = sand.u32 %s101, 1
        %s205 = scalar_lea.sflag [#allocation5], %s204
        %s206 = sand.u32 %s101, 1
        %s207 = smul.addr %s206, 4
        %s208 = scalar_lea.vmem [#allocation4], %s207
        // Predicated region
        $region33: #{tpu_custom_call.1} parent=31 // pred_check
          %p209 = pneg %p114
        $region34: #{tpu_custom_call.1} parent=31 // pred_check_branch
          %211 = sbr.rel (%p209) target = $region36
        $region35: #{tpu_custom_call.1} parent=31 // pred_region
          %213 = dma.done %s205, 64
        $region36: #{tpu_custom_call.1} parent=31 // pred_fallthru
          _
        %p214 = scmp.lt.s32.totalorder %s26, 0
        %s215 = scalar_select %p214, %s26, 0
        %s216 = smul.addr %s215, 8
        %s217 = scalar_lea.vmem %s0, %s216
        %p218 = pneg %p60
        %p219 = pneg %p57
        %p220 = scmp.lt.s32.totalorder %s26, 0
        %s221 = scalar_select %p220, %s26, 0
        %s222 = smul.addr %s221, 8
        %s223 = scalar_lea.vmem %s1, %s222
        %p224 = pneg %p86
        %p225 = pneg %p83
        %s226 = sand.u32 %s101, 1
        %s227 = scalar_lea.sflag [#allocation5], %s226
        %s228 = sand.u32 %s101, 1
        %s229 = smul.addr %s228, 4
        %s230 = scalar_lea.vmem [#allocation4], %s229
        %p231 = pneg %p114
        %p232 = pneg %p111
        %p233 = pneg %p144
        %p234 = pneg %p141
        %s235 = sand.u32 %s131, 1
        %s236 = scalar_lea.sflag [#allocation6], %s235
        %s237 = sand.u32 %s131, 1
        %s238 = smul.addr %s237, 8
        %s239 = scalar_lea.vmem [#allocation7], %s238
        %p240 = scmp.lt.s32.totalorder %s26, 0
        %s241 = scalar_select %p240, %s26, 0
        %s242 = smul.addr %s241, 8
        %s243 = scalar_lea.vmem %s0, %s242
        %p244 = scmp.lt.s32.totalorder %s26, 0
        %s245 = scalar_select %p244, %s26, 0
        %s246 = smul.addr %s245, 8
        %s247 = scalar_lea.vmem %s1, %s246
        %p248 = scmp.eq.s32.totalorder %s27, 0
        // Predicated region
        $region37: #{tpu_custom_call.1} parent=31 // pred_check
          %p249 = pneg %p248
        $region38: #{tpu_custom_call.1} parent=31 // pred_check_branch
          %251 = sbr.rel (%p249) target = $region40
        $region39: #{tpu_custom_call.1} parent=31 // pred_region
          %vm252 = vcmask 1044464
          %253 = vst.msk [vmem:[#allocation2] sm:$0xf] %vm252, 0.0
        $region40: #{tpu_custom_call.1} parent=31 // pred_fallthru
          _
        %p254 = scmp.gt.s32.totalorder %s27, 0
        // Predicated region
        $region41: #{tpu_custom_call.1} parent=31 // pred_check
          %p255 = pneg %p254
        $region42: #{tpu_custom_call.1} parent=31 // pred_check_branch
          %257 = sbr.rel (%p255) target = $region44
        $region43: #{tpu_custom_call.1} parent=31 // pred_region
          %v258 = vld [vmem:[#allocation2 + $0x4] sm:$0xf]
          %260 = vrot.lane.b32.xlu0 %v258, 112
          %v261 = vpop.permute.xlu0 %260
          %vm263 = vcmask 1044464
          %264 = vst.msk [vmem:[#allocation2] sm:$0xf] %vm263, %v261
        $region44: #{tpu_custom_call.1} parent=31 // pred_fallthru
          _
        %v265 = vld [vmem:[%s208] sm:$0xf]
        %vm266 = vcmask 125952
        %267 = vst.msk [vmem:[#allocation2 + $0x4] sm:$0xf] %vm266, %v265
        %v268 = vld [vmem:[#allocation2] sm:$0xff]
        %270 = vst [vmem:[#allocation1] ss:$2 sm:$0xff] %v268
        %v271 = vld.sshfl [vmem:[#allocation1] sm:$0xff pattern:$0x75316420]
        %v272 = vld.sshfl [vmem:[#allocation1 + $0x8] sm:$0xff pattern:$0x75316420]
        %273 = vrot.lane.b32.xlu0 %v271, 2
        %v274 = vpop.permute.xlu0 %273
        %275 = vrot.lane.b32.xlu0 %v272, 2
        %v276 = vpop.permute.xlu0 %275
        %vm277 = vcmask 15360
        %v278 = vsel %vm277, %v274, %v276
        %280 = vst.msk [vmem:[#allocation3] sm:$0xf] %vm266, %v278
        %v281 = vld [vmem:[#allocation2] sm:$0xff]
        %283 = vst [vmem:[#allocation1] ss:$2 sm:$0xff] %v281
        %v284 = vld.sshfl [vmem:[#allocation1] sm:$0xff pattern:$0x75316420]
        %v285 = vld.sshfl [vmem:[#allocation1 + $0x8] sm:$0xff pattern:$0x75316420]
        %286 = vrot.lane.b32.xlu0 %v284, 1
        %v287 = vpop.permute.xlu0 %286
        %288 = vrot.lane.b32.xlu0 %v285, 1
        %v289 = vpop.permute.xlu0 %288
        %vm290 = vcmask 7168
        %v291 = vsel %vm290, %v287, %v289
        %293 = vst.msk [vmem:[#allocation3 + $0x4] sm:$0xf] %vm266, %v291
        %v294 = vld [vmem:[#allocation2 + $0x4] sm:$0xf]
        %295 = vst.msk [vmem:[#allocation3 + $0x8] sm:$0xf] %vm266, %v294
        %v296 = vld [vmem:[#allocation3] sm:$0xff]
        %v297 = vld [vmem:[#allocation3 + $0x8] sm:$0xf]
        %v298 = vld [vmem:[%s243] sm:$0xff]
        %v299 = vld [vmem:[%s247] sm:$0xff]
        %301 = vset.pattern.permute.xlu0 0
        %302 = vperm.xlu0 %301, %v299
        %v303 = vpop.permute.xlu0 %302
        %vm305 = vcmask 97280
        %v307 = vsel %vm305, %v298, 0
        %vm309 = vcmask 1043456
        %v311 = vsel %vm309, %v297, 0
        %313 = vmatpush.msra.mxu0 0.0
        %314 = vmatpush.msra.mxu0 0.0
        %315 = vmatpush.msra.mxu0 0.0
        %316 = vmatpush.msra.mxu0 0.0
        %317 = vmatpush.msra.mxu0 0.0
        %318 = vmatpush.msra.mxu0 0.0
        %319 = vmatpush.msra.mxu0 0.0
        %320 = vmatpush.msra.mxu0 0.0
        %321 = vmatpush.msra.mxu0 0.0
        %322 = vmatpush.msra.mxu0 0.0
        %323 = vmatpush.msra.mxu0 0.0
        %324 = vmatpush.msra.mxu0 0.0
        %325 = vmatpush.msra.mxu0 0.0
        %326 = vmatpush.msra.mxu0 0.0
        %327 = vmatpush.msra.mxu0 %v311
        %328 = vmatpush.msra.mxu0 %v296
        %329 = vmatmul.f32.gmra.mxu0 %v307
        %v330 = vpop.f32.mrf.mxu0
        %v331 = vadd.f32 %v303, %v330
        %332 = vdwg.mxu0
        %vm333 = vcmask 130048
        %334 = vst.msk [vmem:[%s239] sm:$0xff] %vm333, %v331
        %s335 = sand.u32 %s131, 1
        %s336 = scalar_lea.sflag [#allocation6], %s335
        %s337 = sand.u32 %s131, 1
        %s338 = smul.addr %s337, 8
        %s339 = scalar_lea.vmem [#allocation7], %s338
        // Predicated region
        $region45: #{tpu_custom_call.1} parent=31 // pred_check
          %p340 = pneg %p141
        $region46: #{tpu_custom_call.1} parent=31 // pred_check_branch
          %342 = sbr.rel (%p340) target = $region48
        $region47: #{tpu_custom_call.1} parent=31 // pred_region
          %344 = vsyncadd %s336, 0
          %s345 = sadd.s32 %s27, %s26
          %s346 = sadd.s32 %s345, %s25
          %s347 = smul.addr %s346, 8
          %s348 = scalar_lea.hbm %s3, %s347
          %s350 = sshll.u32 %s339, 4
          %s351 = int_to_ptr.vmem [resolvable:$true] %s350
          %s352 = sshll.u32 %s348, 4
          %s353 = int_to_ptr.hbm [resolvable:$true] %s352
          %355 = dma.vmem_to_hbm [thread:$0]  %s351, 128, %s353, %s336
        $region48: #{tpu_custom_call.1} parent=31 // pred_fallthru
          _
      $region32: #{tpu_custom_call.1} parent=5 // pred_fallthru
        _
      %p356 = scmp.le.s32.totalorder 2, %s15
      // Predicated region
      $region49: #{tpu_custom_call.1} parent=5 // pred_check
        %p357 = pneg %p356
      $region50: #{tpu_custom_call.1} parent=5 // pred_check_branch
        %359 = sbr.rel (%p357) target = $region52
      $region51: #{tpu_custom_call.1} parent=5 // pred_region
        %s360 = ssub.s32 %s15, 2
        // Predicated region
        $region53: #{tpu_custom_call.1} parent=51 // pred_check
          %p361 = pneg %p147
        $region54: #{tpu_custom_call.1} parent=51 // pred_check_branch
          %363 = sbr.rel (%p361) target = $region56
        $region55: #{tpu_custom_call.1} parent=51 // pred_region
          %s364 = sand.u32 %s132, 1
          %s365 = scalar_lea.sflag [#allocation6], %s364
          %s366 = sand.u32 %s132, 1
          %s367 = smul.addr %s366, 8
          %s368 = scalar_lea.vmem [#allocation7], %s367
          %370 = dma.done %s365, 128
        $region56: #{tpu_custom_call.1} parent=51 // pred_fallthru
          _
      $region52: #{tpu_custom_call.1} parent=5 // pred_fallthru
        _
    $region6: #{tpu_custom_call.1} parent=1 // loop_footer
      %s19 = sadd.s32 1, %s15
    $region7: #{tpu_custom_call.1} parent=1 // loop_footer_branch
      %14 = sbr.rel target = $region3
    $region8: #{tpu_custom_call.1} parent=1 // loop_exit
      _
    %371 = vsyncpa [#allocation5], 1
    %s372 = scalar_lea.sflag [#allocation5], 1
    %373 = vsyncpa %s372, 1
    %374 = vsyncpa [#allocation6], 1
    %s375 = scalar_lea.sflag [#allocation6], 1
    %376 = vsyncpa %s375, 1

// kernel: tpu_custom_call.1
$region0: #{tpu_custom_call.1}
  #allocation0 [shape = 'u32[]', space=smem, size = 0x4, offset = 0x4, fixed_abs, tag = 'smem constant byte address 0x4 - core index']
  #allocation1 [shape = 'u32[72,128]{1,0:T(1,128)}', space=vmem, size = 0x9000, scoped, tag = 'internal scratch']
  #allocation2 [shape = 'f32[4,144]{1,0:T(4,128)}', space=vmem, size = 0x1000, scoped, tag = 'scratch operand']
  #allocation3 [shape = 'f32[12,16]{1,0:T(8,128)}', space=vmem, size = 0x2000, scoped, tag = 'scratch operand']
  %s0 = inlined_call_operand.vmem [shape: f32[8,12], index: 0, kind: input, shape index: {}]
  %s1 = inlined_call_operand.vmem [shape: f32[8,1], index: 1, kind: input, shape index: {}]
  %s2 = inlined_call_operand.hbm [shape: f32[2,4,16], index: 2, kind: input, shape index: {}]
  %s3 = inlined_call_operand.hbm [shape: f32[2,8,16], index: 3, kind: output, shape index: {}]
  %s4 = sld [smem:[#allocation0]]
  $region57: #{tpu_custom_call.1} parent=0
    _
  %s6 = ssub.s32 1, %s4
  %s7 = scalar_select 0, %s6, %s4
  $region1: #{tpu_custom_call.1} parent=0
    #allocation4 [shape = 'u8[4096]{0}', space=vmem, size = 0x1000, scoped, tag = 'input window, operand 2']
    #allocation5 [shape = 's32[2]{0}', space=sflag, size = 0x8, scoped, tag = 'scoped memory for tpu_custom_call.1']
    #allocation6 [shape = 's32[2]{0}', space=sflag, size = 0x8, scoped, tag = 'scoped memory for tpu_custom_call.1']
    #allocation7 [shape = 'u8[8192]{0}', space=vmem, size = 0x2000, scoped, tag = 'output window, operand 0']
    %8 = vsyncpa [#allocation5], 0
    %s9 = scalar_lea.sflag [#allocation5], 1
    %10 = vsyncpa %s9, 0
    %11 = vsyncpa [#allocation6], 0
    %s12 = scalar_lea.sflag [#allocation6], 1
    %13 = vsyncpa %s12, 0
    loop: start=0, step=1, limit=4
    $region2: #{tpu_custom_call.1} parent=1 // loop_pre_header
      _
    $region3: #{tpu_custom_call.1} parent=1 // loop_header
      %s15 = sphi 0, %s19
      %p16 = scmp.ge.s32.totalorder %s15, 4
      %s22 = sphi 0, %s41
      %s23 = sphi 0, %s37
      %s24 = sphi 0, %s33
      %s25 = sphi 0, %s22
      %s26 = sphi 0, %s23
      %s27 = sphi 0, %s24
      %s28 = sphi 0, %s25
      %s29 = sphi 0, %s26
      %s30 = sphi 0, %s27
      %s44 = sphi 0, %s46
      %s47 = sphi 0, %s44
      %s48 = sphi 0, %s47
      %s64 = sphi 0, %s48
      %s70 = sphi 0, %s72
      %s73 = sphi 0, %s70
      %s74 = sphi 0, %s73
      %s90 = sphi 0, %s74
      %s98 = sphi 0, %s100
      %s101 = sphi 0, %s98
      %s102 = sphi 0, %s101
      %s118 = sphi 0, %s102
      %s128 = sphi 0, %s130
      %s131 = sphi 0, %s128
      %s132 = sphi 0, %s131
      %s148 = sphi 0, %s132
    $region4: #{tpu_custom_call.1} parent=1 // loop_header_branch
      %18 = sbr.rel (%p16) target = $region8
    $region5: #{tpu_custom_call.1} parent=1 // loop_body
      %s20 = ssub.s32 %s15, 1
      %s21 = ssub.s32 %s15, 2
      %s31 = sadd.s32 1, %s24
      %p32 = scmp.ge.s32.totalorder %s31, 1
      %s33 = scalar_select %p32, 0, %s31
      %s34 = sadd.s32 1, %s23
      %s35 = scalar_select %p32, %s34, %s23
      %p36 = scmp.ge.s32.totalorder %s35, 1
      %s37 = scalar_select %p36, 0, %s35
      %s38 = sadd.s32 1, %s22
      %s39 = scalar_select %p36, %s38, %s22
      %p40 = scmp.ge.s32.totalorder %s39, 2
      %s41 = scalar_select %p40, 0, %s39
      %s42 = ssub.s32 %s23, %s37
      %p43 = scmp.eq.s32.totalorder %s42, 0
      %s45 = sadd.s32 %s44, 1
      %s46 = scalar_select %p43, %s44, %s45
      %p49 = pneg %p43
      %p50 = scmp.eq.s32.totalorder %s15, 1
      %p51 = por %p49, %p50
      %p52 = scmp.ne.s32.totalorder %s44, %s47
      %p53 = scmp.eq.s32.totalorder %s15, 0
      %p54 = por %p52, %p53
      %p55 = scmp.ne.s32.totalorder %s44, %s47
      %p56 = scmp.eq.s32.totalorder %s20, 1
      %p57 = por %p55, %p56
      %p58 = scmp.ne.s32.totalorder %s47, %s48
      %p59 = scmp.eq.s32.totalorder %s20, 0
      %p60 = por %p58, %p59
      %p61 = scmp.ne.s32.totalorder %s47, %s48
      %p62 = scmp.eq.s32.totalorder %s21, 1
      %p63 = por %p61, %p62
      %p65 = scmp.ne.s32.totalorder %s48, %s64
      %p66 = scmp.eq.s32.totalorder %s21, 0
      %p67 = por %p65, %p66
      %s68 = ssub.s32 %s23, %s37
      %p69 = scmp.eq.s32.totalorder %s68, 0
      %s71 = sadd.s32 %s70, 1
      %s72 = scalar_select %p69, %s70, %s71
      %p75 = pneg %p69
      %p76 = scmp.eq.s32.totalorder %s15, 1
      %p77 = por %p75, %p76
      %p78 = scmp.ne.s32.totalorder %s70, %s73
      %p79 = scmp.eq.s32.totalorder %s15, 0
      %p80 = por %p78, %p79
      %p81 = scmp.ne.s32.totalorder %s70, %s73
      %p82 = scmp.eq.s32.totalorder %s20, 1
      %p83 = por %p81, %p82
      %p84 = scmp.ne.s32.totalorder %s73, %s74
      %p85 = scmp.eq.s32.totalorder %s20, 0
      %p86 = por %p84, %p85
      %p87 = scmp.ne.s32.totalorder %s73, %s74
      %p88 = scmp.eq.s32.totalorder %s21, 1
      %p89 = por %p87, %p88
      %p91 = scmp.ne.s32.totalorder %s74, %s90
      %p92 = scmp.eq.s32.totalorder %s21, 0
      %p93 = por %p91, %p92
      %s94 = ssub.s32 %s22, %s41
      %s95 = ssub.s32 %s24, %s33
      %s96 = sor.u32 %s94, %s95
      %p97 = scmp.eq.s32.totalorder %s96, 0
      %s99 = sadd.s32 %s98, 1
      %s100 = scalar_select %p97, %s98, %s99
      %p103 = pneg %p97
      %p104 = scmp.eq.s32.totalorder %s15, 1
      %p105 = por %p103, %p104
      %p106 = scmp.ne.s32.totalorder %s98, %s101
      %p107 = scmp.eq.s32.totalorder %s15, 0
      %p108 = por %p106, %p107
      %p109 = scmp.ne.s32.totalorder %s98, %s101
      %p110 = scmp.eq.s32.totalorder %s20, 1
      %p111 = por %p109, %p110
      %p112 = scmp.ne.s32.totalorder %s101, %s102
      %p113 = scmp.eq.s32.totalorder %s20, 0
      %p114 = por %p112, %p113
      %p115 = scmp.ne.s32.totalorder %s101, %s102
      %p116 = scmp.eq.s32.totalorder %s21, 1
      %p117 = por %p115, %p116
      %p119 = scmp.ne.s32.totalorder %s102, %s118
      %p120 = scmp.eq.s32.totalorder %s21, 0
      %p121 = por %p119, %p120
      %s122 = ssub.s32 %s22, %s41
      %s123 = ssub.s32 %s23, %s37
      %s124 = sor.u32 %s122, %s123
      %s125 = ssub.s32 %s24, %s33
      %s126 = sor.u32 %s124, %s125
      %p127 = scmp.eq.s32.totalorder %s126, 0
      %s129 = sadd.s32 %s128, 1
      %s130 = scalar_select %p127, %s128, %s129
      %p133 = pneg %p127
      %p134 = scmp.eq.s32.totalorder %s15, 1
      %p135 = por %p133, %p134
      %p136 = scmp.ne.s32.totalorder %s128, %s131
      %p137 = scmp.eq.s32.totalorder %s15, 0
      %p138 = por %p136, %p137
      %p139 = scmp.ne.s32.totalorder %s128, %s131
      %p140 = scmp.eq.s32.totalorder %s20, 1
      %p141 = por %p139, %p140
      %p142 = scmp.ne.s32.totalorder %s131, %s132
      %p143 = scmp.eq.s32.totalorder %s20, 0
      %p144 = por %p142, %p143
      %p145 = scmp.ne.s32.totalorder %s131, %s132
      %p146 = scmp.eq.s32.totalorder %s21, 1
      %p147 = por %p145, %p146
      %p149 = scmp.ne.s32.totalorder %s132, %s148
      %p150 = scmp.eq.s32.totalorder %s21, 0
      %p151 = por %p149, %p150
      %p152 = scmp.le.s32.totalorder 1, %s15
      %p153 = scmp.lt.s32.totalorder %s15, 3
      %p154 = pnand %p152, %p153
      %p155 = pneg %p154
      // Predicated region
      $region9: #{tpu_custom_call.1} parent=5 // pred_check
        _
      $region10: #{tpu_custom_call.1} parent=5 // pred_check_branch
        %157 = sbr.rel (%p154) target = $region12
      $region11: #{tpu_custom_call.1} parent=5 // pred_region
        %s158 = ssub.s32 %s15, 1
        // Predicated region
        $region13: #{tpu_custom_call.1} parent=11 // pred_check
          %p159 = pneg %p60
        $region14: #{tpu_custom_call.1} parent=11 // pred_check_branch
          %161 = sbr.rel (%p159) target = $region16
        $region15: #{tpu_custom_call.1} parent=11 // pred_region
          %p162 = scmp.lt.s32.totalorder %s26, 0
          %s163 = scalar_select %p162, %s26, 0
          %s164 = smul.addr %s163, 8
          %s165 = scalar_lea.vmem %s0, %s164
        $region16: #{tpu_custom_call.1} parent=11 // pred_fallthru
          _
        // Predicated region
        $region17: #{tpu_custom_call.1} parent=11 // pred_check
          %p166 = pneg %p86
        $region18: #{tpu_custom_call.1} parent=11 // pred_check_branch
          %168 = sbr.rel (%p166) target = $region20
        $region19: #{tpu_custom_call.1} parent=11 // pred_region
          %p169 = scmp.lt.s32.totalorder %s26, 0
          %s170 = scalar_select %p169, %s26, 0
          %s171 = smul.addr %s170, 8
          %s172 = scalar_lea.vmem %s1, %s171
        $region20: #{tpu_custom_call.1} parent=11 // pred_fallthru
          _
      $region12: #{tpu_custom_call.1} parent=5 // pred_fallthru
        _
      %p173 = scmp.lt.s32.totalorder %s15, 2
      // Predicated region
      $region21: #{tpu_custom_call.1} parent=5 // pred_check
        %p174 = pneg %p173
      $region22: #{tpu_custom_call.1} parent=5 // pred_check_branch
        %176 = sbr.rel (%p174) target = $region24
      $region23: #{tpu_custom_call.1} parent=5 // pred_region
        // Predicated region
        $region25: #{tpu_custom_call.1} parent=23 // pred_check
          %p177 = pneg %p108
        $region26: #{tpu_custom_call.1} parent=23 // pred_check_branch
          %179 = sbr.rel (%p177) target = $region28
        $region27: #{tpu_custom_call.1} parent=23 // pred_region
          %s180 = sand.u32 %s98, 1
          %s181 = scalar_lea.sflag [#allocation5], %s180
          %s182 = sand.u32 %s98, 1
          %s183 = smul.addr %s182, 4
          %s184 = scalar_lea.vmem [#allocation4], %s183
          %186 = vsyncadd %s181, 0
          %s187 = sadd.s32 %s24, %s22
          %s188 = smul.addr %s187, 4
          %s189 = scalar_lea.hbm %s2, %s188
          %s191 = sshll.u32 %s189, 4
          %s192 = int_to_ptr.hbm [resolvable:$true] %s191
          %s193 = sshll.u32 %s184, 4
          %s194 = int_to_ptr.vmem [resolvable:$true] %s193
          %196 = dma.hbm_to_vmem [thread:$0]  %s192, 64, %s194, %s181
        $region28: #{tpu_custom_call.1} parent=23 // pred_fallthru
          _
      $region24: #{tpu_custom_call.1} parent=5 // pred_fallthru
        _
      %p197 = scmp.le.s32.totalorder 1, %s15
      %p198 = scmp.lt.s32.totalorder %s15, 3
      %p199 = pnand %p197, %p198
      %p200 = pneg %p199
      // Predicated region
      $region29: #{tpu_custom_call.1} parent=5 // pred_check
        _
      $region30: #{tpu_custom_call.1} parent=5 // pred_check_branch
        %202 = sbr.rel (%p199) target = $region32
      $region31: #{tpu_custom_call.1} parent=5 // pred_region
        %s203 = ssub.s32 %s15, 1
        %s204 = sand.u32 %s101, 1
        %s205 = scalar_lea.sflag [#allocation5], %s204
        %s206 = sand.u32 %s101, 1
        %s207 = smul.addr %s206, 4
        %s208 = scalar_lea.vmem [#allocation4], %s207
        // Predicated region
        $region33: #{tpu_custom_call.1} parent=31 // pred_check
          %p209 = pneg %p114
        $region34: #{tpu_custom_call.1} parent=31 // pred_check_branch
          %211 = sbr.rel (%p209) target = $region36
        $region35: #{tpu_custom_call.1} parent=31 // pred_region
          %213 = dma.done %s205, 64
        $region36: #{tpu_custom_call.1} parent=31 // pred_fallthru
          _
        %p214 = scmp.lt.s32.totalorder %s26, 0
        %s215 = scalar_select %p214, %s26, 0
        %s216 = smul.addr %s215, 8
        %s217 = scalar_lea.vmem %s0, %s216
        %p218 = pneg %p60
        %p219 = pneg %p57
        %p220 = scmp.lt.s32.totalorder %s26, 0
        %s221 = scalar_select %p220, %s26, 0
        %s222 = smul.addr %s221, 8
        %s223 = scalar_lea.vmem %s1, %s222
        %p224 = pneg %p86
        %p225 = pneg %p83
        %s226 = sand.u32 %s101, 1
        %s227 = scalar_lea.sflag [#allocation5], %s226
        %s228 = sand.u32 %s101, 1
        %s229 = smul.addr %s228, 4
        %s230 = scalar_lea.vmem [#allocation4], %s229
        %p231 = pneg %p114
        %p232 = pneg %p111
        %p233 = pneg %p144
        %p234 = pneg %p141
        %s235 = sand.u32 %s131, 1
        %s236 = scalar_lea.sflag [#allocation6], %s235
        %s237 = sand.u32 %s131, 1
        %s238 = smul.addr %s237, 8
        %s239 = scalar_lea.vmem [#allocation7], %s238
        %p240 = scmp.lt.s32.totalorder %s26, 0
        %s241 = scalar_select %p240, %s26, 0
        %s242 = smul.addr %s241, 8
        %s243 = scalar_lea.vmem %s0, %s242
        %p244 = scmp.lt.s32.totalorder %s26, 0
        %s245 = scalar_select %p244, %s26, 0
        %s246 = smul.addr %s245, 8
        %s247 = scalar_lea.vmem %s1, %s246
        %p248 = scmp.eq.s32.totalorder %s27, 0
        // Predicated region
        $region37: #{tpu_custom_call.1} parent=31 // pred_check
          %p249 = pneg %p248
        $region38: #{tpu_custom_call.1} parent=31 // pred_check_branch
          %251 = sbr.rel (%p249) target = $region40
        $region39: #{tpu_custom_call.1} parent=31 // pred_region
          %vm252 = vcmask 1044464
          %253 = vst.msk [vmem:[#allocation2] sm:$0xf] %vm252, 0.0
        $region40: #{tpu_custom_call.1} parent=31 // pred_fallthru
          _
        %p254 = scmp.gt.s32.totalorder %s27, 0
        // Predicated region
        $region41: #{tpu_custom_call.1} parent=31 // pred_check
          %p255 = pneg %p254
        $region42: #{tpu_custom_call.1} parent=31 // pred_check_branch
          %257 = sbr.rel (%p255) target = $region44
        $region43: #{tpu_custom_call.1} parent=31 // pred_region
          %v258 = vld [vmem:[#allocation2 + $0x4] sm:$0xf]
          %260 = vrot.lane.b32.xlu0 %v258, 112
          %v261 = vpop.permute.xlu0 %260
          %vm263 = vcmask 1044464
          %264 = vst.msk [vmem:[#allocation2] sm:$0xf] %vm263, %v261
        $region44: #{tpu_custom_call.1} parent=31 // pred_fallthru
          _
        %v265 = vld [vmem:[%s208] sm:$0xf]
        %vm266 = vcmask 125952
        %267 = vst.msk [vmem:[#allocation2 + $0x4] sm:$0xf] %vm266, %v265
        %v268 = vld [vmem:[#allocation2] sm:$0xff]
        %270 = vst [vmem:[#allocation1] ss:$2 sm:$0xff] %v268
        %v271 = vld.sshfl [vmem:[#allocation1] sm:$0xff pattern:$0x75316420]
        %v272 = vld.sshfl [vmem:[#allocation1 + $0x8] sm:$0xff pattern:$0x75316420]
        %273 = vrot.lane.b32.xlu0 %v271, 2
        %v274 = vpop.permute.xlu0 %273
        %275 = vrot.lane.b32.xlu0 %v272, 2
        %v276 = vpop.permute.xlu0 %275
        %vm277 = vcmask 15360
        %v278 = vsel %vm277, %v274, %v276
        %280 = vst.msk [vmem:[#allocation3] sm:$0xf] %vm266, %v278
        %v281 = vld [vmem:[#allocation2] sm:$0xff]
        %283 = vst [vmem:[#allocation1] ss:$2 sm:$0xff] %v281
        %v284 = vld.sshfl [vmem:[#allocation1] sm:$0xff pattern:$0x75316420]
        %v285 = vld.sshfl [vmem:[#allocation1 + $0x8] sm:$0xff pattern:$0x75316420]
        %286 = vrot.lane.b32.xlu0 %v284, 1
        %v287 = vpop.permute.xlu0 %286
        %288 = vrot.lane.b32.xlu0 %v285, 1
        %v289 = vpop.permute.xlu0 %288
        %vm290 = vcmask 7168
        %v291 = vsel %vm290, %v287, %v289
        %293 = vst.msk [vmem:[#allocation3 + $0x4] sm:$0xf] %vm266, %v291
        %v294 = vld [vmem:[#allocation2 + $0x4] sm:$0xf]
        %295 = vst.msk [vmem:[#allocation3 + $0x8] sm:$0xf] %vm266, %v294
        %v296 = vld [vmem:[#allocation3] sm:$0xff]
        %v297 = vld [vmem:[#allocation3 + $0x8] sm:$0xf]
        %v298 = vld [vmem:[%s243] sm:$0xff]
        %v299 = vld [vmem:[%s247] sm:$0xff]
        %301 = vset.pattern.permute.xlu0 0
        %302 = vperm.xlu0 %301, %v299
        %v303 = vpop.permute.xlu0 %302
        %vm305 = vcmask 97280
        %v307 = vsel %vm305, %v298, 0
        %vm309 = vcmask 1043456
        %v311 = vsel %vm309, %v297, 0
        %313 = vmatpush.msra.mxu0 0.0
        %314 = vmatpush.msra.mxu0 0.0
        %315 = vmatpush.msra.mxu0 0.0
        %316 = vmatpush.msra.mxu0 0.0
        %317 = vmatpush.msra.mxu0 0.0
        %318 = vmatpush.msra.mxu0 0.0
        %319 = vmatpush.msra.mxu0 0.0
        %320 = vmatpush.msra.mxu0 0.0
        %321 = vmatpush.msra.mxu0 0.0
        %322 = vmatpush.msra.mxu0 0.0
        %323 = vmatpush.msra.mxu0 0.0
        %324 = vmatpush.msra.mxu0 0.0
        %325 = vmatpush.msra.mxu0 0.0
        %326 = vmatpush.msra.mxu0 0.0
        %327 = vmatpush.msra.mxu0 %v311
        %328 = vmatpush.msra.mxu0 %v296
        %329 = vmatmul.f32.gmra.mxu0 %v307
        %v330 = vpop.f32.mrf.mxu0
        %v331 = vadd.f32 %v303, %v330
        %332 = vdwg.mxu0
        %vm333 = vcmask 130048
        %334 = vst.msk [vmem:[%s239] sm:$0xff] %vm333, %v331
        %s335 = sand.u32 %s131, 1
        %s336 = scalar_lea.sflag [#allocation6], %s335
        %s337 = sand.u32 %s131, 1
        %s338 = smul.addr %s337, 8
        %s339 = scalar_lea.vmem [#allocation7], %s338
        // Predicated region
        $region45: #{tpu_custom_call.1} parent=31 // pred_check
          %p340 = pneg %p141
        $region46: #{tpu_custom_call.1} parent=31 // pred_check_branch
          %342 = sbr.rel (%p340) target = $region48
        $region47: #{tpu_custom_call.1} parent=31 // pred_region
          %344 = vsyncadd %s336, 0
          %s345 = sadd.s32 %s27, %s26
          %s346 = sadd.s32 %s345, %s25
          %s347 = smul.addr %s346, 8
          %s348 = scalar_lea.hbm %s3, %s347
          %s350 = sshll.u32 %s339, 4
          %s351 = int_to_ptr.vmem [resolvable:$true] %s350
          %s352 = sshll.u32 %s348, 4
          %s353 = int_to_ptr.hbm [resolvable:$true] %s352
          %355 = dma.vmem_to_hbm [thread:$0]  %s351, 128, %s353, %s336
        $region48: #{tpu_custom_call.1} parent=31 // pred_fallthru
          _
      $region32: #{tpu_custom_call.1} parent=5 // pred_fallthru
        _
      %p356 = scmp.le.s32.totalorder 2, %s15
      // Predicated region
      $region49: #{tpu_custom_call.1} parent=5 // pred_check
        %p357 = pneg %p356
      $region50: #{tpu_custom_call.1} parent=5 // pred_check_branch
        %359 = sbr.rel (%p357) target = $region52
      $region51: #{tpu_custom_call.1} parent=5 // pred_region
        %s360 = ssub.s32 %s15, 2
        // Predicated region
        $region53: #{tpu_custom_call.1} parent=51 // pred_check
          %p361 = pneg %p147
        $region54: #{tpu_custom_call.1} parent=51 // pred_check_branch
          %363 = sbr.rel (%p361) target = $region56
        $region55: #{tpu_custom_call.1} parent=51 // pred_region
          %s364 = sand.u32 %s132, 1
          %s365 = scalar_lea.sflag [#allocation6], %s364
          %s366 = sand.u32 %s132, 1
          %s367 = smul.addr %s366, 8
          %s368 = scalar_lea.vmem [#allocation7], %s367
          %370 = dma.done %s365, 128
        $region56: #{tpu_custom_call.1} parent=51 // pred_fallthru
          _
      $region52: #{tpu_custom_call.1} parent=5 // pred_fallthru
        _
    $region6: #{tpu_custom_call.1} parent=1 // loop_footer
      %s19 = sadd.s32 1, %s15
    $region7: #{tpu_custom_call.1} parent=1 // loop_footer_branch
      %14 = sbr.rel target = $region3
    $region8: #{tpu_custom_call.1} parent=1 // loop_exit
      _
    %371 = vsyncpa [#allocation5], 1
    %s372 = scalar_lea.sflag [#allocation5], 1
    %373 = vsyncpa %s372, 1
    %374 = vsyncpa [#allocation6], 1
    %s375 = scalar_lea.sflag [#allocation6], 1
    %376 = vsyncpa %s375, 1

</llo_original>
